<compile_context>
chip_gen: v7x
topology: tpu7x:2x2x1
jax: 0.10.0
libtpu: 0.0.40
codegen_flags: <defaults>
</compile_context>

<pallas_src>
import functools
import math

import jax
import jax.numpy as jnp
from jax import lax
from jax.experimental import pallas as pl
from jax.experimental.pallas import tpu as pltpu


_INV_SQRT2 = 0.7071067811865476  # 1 / sqrt(2)


def _solu_kernel(x_ref, o_ref, *, temperature, alpha):
    # Load the (block_rows, D) tile; compute in f32 for stability and v5e compat.
    x = x_ref[...].astype(jnp.float32)

    # Numerically-stable softmax over the last (lane) axis.
    s = x * jnp.float32(1.0 / temperature)
    m = jnp.max(s, axis=-1, keepdims=True)
    e = jnp.exp(s - m)
    denom = jnp.sum(e, axis=-1, keepdims=True)
    # approx=True -> EUP vrcp in its own bundle slot; error is negligible for a
    # softmax denominator (>= 1 by construction).
    softmax = e * pl.reciprocal(denom, approx=True)

    # Exact-erf GELU gate (matches PyTorch nn.GELU(approximate='none')):
    #   gelu(x) = x * 0.5 * (1 + erf(x / sqrt(2)))
    gelu_gate = 0.5 * (1.0 + lax.erf(x * jnp.float32(_INV_SQRT2)))

    # Factored blend: out = x * ((1-alpha)*gelu_gate + alpha*softmax).
    # Saves one full-tile multiply + one f32 temporary vs computing gelu and
    # solu separately and then mixing.
    out = x * (jnp.float32(1.0 - alpha) * gelu_gate + jnp.float32(alpha) * softmax)
    o_ref[...] = out.astype(o_ref.dtype)


def _pick_block_rows(rows, d):
    """Row tile sized to ~2 MiB of f32 per block, multiple of 16 sublanes.

    - multiple of 16 satisfies both f32 (8) and bf16 (16) sublane packing;
    - ~2 MiB/block keeps per-step VMEM (double-buffered I/O + f32 temps)
      comfortably under the scoped limit on v5e/v6e/v7x while staying near the
      HBM roofline for this memory-bound kernel;
    - never inflate a tiny input up to a huge tile.
    """
    target_bytes = 2 * 1024 * 1024
    br = target_bytes // max(1, d * 4)
    br = max(16, min(1024, (br // 16) * 16))
    rows_16 = ((rows + 15) // 16) * 16
    return min(br, rows_16)


def solu(x, temperature=1.0, alpha=1.0, *, block_rows=None):
    """SoLU forward. x: (..., d); softmax over the last axis."""
    orig_shape = x.shape
    d = orig_shape[-1]
    rows = int(math.prod(orig_shape[:-1]))  # == 1 for 1-D inputs
    x2 = x.reshape(rows, d)

    if block_rows is None:
        block_rows = _pick_block_rows(rows, d)
    # TODO(synk): extremely wide `d` (a single 16-row block exceeding VMEM)
    # would need a two-pass lane-tiled softmax; not needed for MLP-sized d.

    grid = pl.cdiv(rows, block_rows)

    kernel = functools.partial(
        _solu_kernel, temperature=float(temperature), alpha=float(alpha)
    )

    itemsize = jnp.dtype(x.dtype).itemsize
    cost = pl.CostEstimate(
        flops=10 * rows * d,
        transcendentals=2 * rows * d,          # exp + erf per element
        bytes_accessed=2 * rows * d * itemsize,  # read x + write out
    )

    out2 = pl.pallas_call(
        kernel,
        out_shape=jax.ShapeDtypeStruct((rows, d), x.dtype),
        grid_spec=pltpu.PrefetchScalarGridSpec(
            num_scalar_prefetch=0,
            grid=(grid,),
            in_specs=[pl.BlockSpec((block_rows, d), lambda i: (i, 0))],
            out_specs=pl.BlockSpec((block_rows, d), lambda i: (i, 0)),
        ),
        compiler_params=pltpu.CompilerParams(
            dimension_semantics=("parallel",),
            vmem_limit_bytes=32 * 1024 * 1024,
        ),
        cost_estimate=cost,
    )(x2)

    return out2.reshape(orig_shape)


def solu_reference(x, temperature=1.0, alpha=1.0):
    xf = x.astype(jnp.float32)
    sm = jax.nn.softmax(xf * (1.0 / temperature), axis=-1)
    solu_v = xf * sm
    gelu_v = 0.5 * xf * (1.0 + lax.erf(xf / jnp.sqrt(2.0)))
    return ((1.0 - alpha) * gelu_v + alpha * solu_v).astype(x.dtype)


if __name__ == "__main__":
    key = jax.random.PRNGKey(0)
    # Small shape consistent with a transformer MLP activation: (batch, seq, hidden)
    x = jax.random.normal(key, (2, 8, 32), dtype=jnp.float32)

    temperature = 2.0
    alpha = 0.7

    out = solu(x, temperature=temperature, alpha=alpha)
    out = jax.block_until_ready(out)

    ref = solu_reference(x, temperature=temperature, alpha=alpha)
    assert out.shape == x.shape and out.dtype == x.dtype
    # Tolerance accounts for the EUP approximate reciprocal in the softmax denom.
    assert jnp.allclose(out, ref, atol=2e-3, rtol=2e-3), (
        f"max abs err = {jnp.max(jnp.abs(out - ref))}"
    )

    # Exercise a ragged row count (rows not a multiple of the block) to cover
    # the masked-boundary (non-divisible grid) path.
    x2 = jax.random.normal(jax.random.PRNGKey(1), (3, 7, 32), dtype=jnp.float32)
    out_ragged = jax.block_until_ready(solu(x2, temperature=1.5, alpha=0.3))
    ref_ragged = solu_reference(x2, temperature=1.5, alpha=0.3)
    assert jnp.allclose(out_ragged, ref_ragged, atol=2e-3, rtol=2e-3)

    # Explicit multi-block + ragged case with a forced small tile.
    x3 = jax.random.normal(jax.random.PRNGKey(2), (5, 9, 32), dtype=jnp.float32)
    out_multi = jax.block_until_ready(
        solu(x3, temperature=0.8, alpha=0.5, block_rows=16)
    )
    ref_multi = solu_reference(x3, temperature=0.8, alpha=0.5)
    assert jnp.allclose(out_multi, ref_multi, atol=2e-3, rtol=2e-3)

    print("KERNEL_OK")
</pallas_src>

<mosaic_0001>
module attributes {stable_mosaic.version = 11 : i64} {
  func.func @_solu_kernel(%arg0: i32, %arg1: memref<16x32xf32, #tpu.memory_space<vmem>>, %arg2: memref<16x32xf32, #tpu.memory_space<vmem>>) attributes {dimension_semantics = [#tpu.dimension_semantics<parallel>], iteration_bounds = array<i64: 1>, scalar_prefetch = 0 : i64, scratch_operands = 0 : i64, tpu.core_type = #tpu.core_type<tc>, window_params = [{transform_indices = @transform_0, window_bounds = array<i64: 16, 32>}, {transform_indices = @transform_1, window_bounds = array<i64: 16, 32>}]} {
    %c0 = arith.constant 0 : index
    %c0_0 = arith.constant 0 : index
    %0 = vector.load %arg1[%c0, %c0_0] : memref<16x32xf32, #tpu.memory_space<vmem>>, vector<16x32xf32>
    %cst = arith.constant 5.000000e-01 : f32
    %1 = vector.broadcast %cst : f32 to vector<16x32xf32>
    %2 = arith.mulf %0, %1 : vector<16x32xf32>
    %cst_1 = arith.constant dense<0xFF800000> : vector<16xf32>
    %3 = vector.multi_reduction <maximumf>, %2, %cst_1 [1] : vector<16x32xf32> to vector<16xf32>
    %4 = vector.shape_cast %3 : vector<16xf32> to vector<16x1xf32>
    %5 = vector.broadcast %4 : vector<16x1xf32> to vector<16x32xf32>
    %6 = arith.subf %2, %5 : vector<16x32xf32>
    %7 = math.exp %6 : vector<16x32xf32>
    %cst_2 = arith.constant dense<0.000000e+00> : vector<16xf32>
    %8 = vector.multi_reduction <add>, %7, %cst_2 [1] : vector<16x32xf32> to vector<16xf32>
    %9 = vector.shape_cast %8 : vector<16xf32> to vector<16x1xf32>
    %10 = tpu.reciprocal %9 {approx = true} : vector<16x1xf32> -> vector<16x1xf32>
    %11 = vector.broadcast %10 : vector<16x1xf32> to vector<16x32xf32>
    %12 = arith.mulf %7, %11 : vector<16x32xf32>
    %cst_3 = arith.constant 0.707106769 : f32
    %13 = vector.broadcast %cst_3 : f32 to vector<16x32xf32>
    %14 = arith.mulf %0, %13 : vector<16x32xf32>
    %15 = math.erf %14 : vector<16x32xf32>
    %cst_4 = arith.constant 1.000000e+00 : f32
    %16 = vector.broadcast %cst_4 : f32 to vector<16x32xf32>
    %17 = arith.addf %16, %15 : vector<16x32xf32>
    %cst_5 = arith.constant 5.000000e-01 : f32
    %18 = vector.broadcast %cst_5 : f32 to vector<16x32xf32>
    %19 = arith.mulf %18, %17 : vector<16x32xf32>
    %cst_6 = arith.constant 3.000000e-01 : f32
    %20 = vector.broadcast %cst_6 : f32 to vector<16x32xf32>
    %21 = arith.mulf %20, %19 : vector<16x32xf32>
    %cst_7 = arith.constant 0.699999988 : f32
    %22 = vector.broadcast %cst_7 : f32 to vector<16x32xf32>
    %23 = arith.mulf %22, %12 : vector<16x32xf32>
    %24 = arith.addf %21, %23 : vector<16x32xf32>
    %25 = arith.mulf %0, %24 : vector<16x32xf32>
    %c0_8 = arith.constant 0 : index
    %c0_9 = arith.constant 0 : index
    %26 = vector.load %arg2[%c0_8, %c0_9] : memref<16x32xf32, #tpu.memory_space<vmem>>, vector<16x32xf32>
    tpu.vector_store %arg2[%c0_8, %c0_9], %25 {strides = array<i32>} : memref<16x32xf32, #tpu.memory_space<vmem>>, vector<16x32xf32>,
    return
  }
  func.func @transform_0(%arg0: i32) -> (i32, i32) {
    %c0_i32 = arith.constant 0 : i32
    %c0_i32_0 = arith.constant 0 : i32
    return %arg0, %c0_i32 : i32, i32
  }
  func.func @transform_1(%arg0: i32) -> (i32, i32) {
    %c0_i32 = arith.constant 0 : i32
    %c0_i32_0 = arith.constant 0 : i32
    return %arg0, %c0_i32 : i32, i32
  }
}

</mosaic_0001>

<llo_original>
// kernel: tpu_custom_call.1
$region0: #{tpu_custom_call.1}
  #allocation0 [shape = 'u32[]', space=smem, size = 0x4, offset = 0x4, fixed_abs, tag = 'smem constant byte address 0x4 - core index']
  #allocation1 [shape = 'u32[144,128]{1,0:T(1,128)}', space=vmem, size = 0x12000, scoped, tag = 'internal scratch']
  %s0 = inlined_call_operand.hbm [shape: f32[16,32], index: 0, kind: input, shape index: {}]
  %s1 = inlined_call_operand.hbm [shape: f32[16,32], index: 1, kind: output, shape index: {}]
  %s2 = sld [smem:[#allocation0]]
  $region18: #{tpu_custom_call.1} parent=0
    _
  %s4 = ssub.s32 1, %s2
  %s5 = scalar_select 0, %s4, %s2
  $region1: #{tpu_custom_call.1} parent=0
    #allocation2 [shape = 'u8[8192]{0}', space=vmem, size = 0x2000, scoped, tag = 'input window, operand 0, single buffered']
    #allocation3 [shape = 's32[1]{0}', space=sflag, size = 0x4, scoped, tag = 'scoped memory for tpu_custom_call.1']
    #allocation4 [shape = 's32[1]{0}', space=sflag, size = 0x4, scoped, tag = 'scoped memory for tpu_custom_call.1']
    #allocation5 [shape = 'u8[8192]{0}', space=vmem, size = 0x2000, scoped, tag = 'output window, operand 0, single buffered']
    %6 = vsyncpa [#allocation3], 0
    %7 = vsyncpa [#allocation4], 0
    // Predicated region
    $region2: #{tpu_custom_call.1} parent=1 // pred_check
      _
    $region3: #{tpu_custom_call.1} parent=1 // pred_check_branch
      %9 = sbr.rel (0) target = $region5
    $region4: #{tpu_custom_call.1} parent=1 // pred_region
      %s11 = ssub.s32 256, 256
      %12 = vsyncadd [#allocation3], %s11
      %s13 = sshll.u32 [#allocation2], 4
      %s14 = int_to_ptr.vmem [resolvable:$true] %s13
      %19 = dma.hbm_to_vmem [thread:$0]  %s0, 256, %s14, [#allocation3], 128, 128, 8
    $region5: #{tpu_custom_call.1} parent=1 // pred_fallthru
      _
    // Predicated region
    $region6: #{tpu_custom_call.1} parent=1 // pred_check
      _
    $region7: #{tpu_custom_call.1} parent=1 // pred_check_branch
      %21 = sbr.rel (0) target = $region9
    $region8: #{tpu_custom_call.1} parent=1 // pred_region
      %22 = dma.done [#allocation3], 256
    $region9: #{tpu_custom_call.1} parent=1 // pred_fallthru
      _
    %v23 = vld [vmem:[#allocation2] sm:$0xff]
    %v24 = vld [vmem:[#allocation2 + $0x8] sm:$0xff]
    %v25 = vmul.f32 %v23, 0.5
    %v26 = vmul.f32 %v24, 0.5
    %vm27 = vcmask 261120
    %v28 = vsel %vm27, %v25, -inf
    %29 = vmax.xlane.f32.xlu0 %v28
    %v30 = vpop.xlane.xlu0 %29
    %v31 = vsel %vm27, %v26, -inf
    %32 = vmax.xlane.f32.xlu0 %v31
    %v33 = vpop.xlane.xlu0 %32
    %v34 = vsub.f32 %v25, %v30
    %v35 = vsub.f32 %v26, %v33
    %v36 = vmul.f32 %v34, 1.442695
    %v37 = vpow.pop %v36
    %v38 = vmul.f32 %v35, 1.442695
    %v39 = vpow.pop %v38
    %v40 = vsel %vm27, %v37, 0.0
    %41 = vadd.xlane.f32.xlu0 %v40
    %v42 = vpop.xlane.xlu0 %41
    %v43 = vsel %vm27, %v39, 0.0
    %44 = vadd.xlane.f32.xlu0 %v43
    %v45 = vpop.xlane.xlu0 %44
    %v46 = vrcp.pop %v42
    %v47 = vrcp.pop %v45
    %v48 = vmul.f32 %v37, %v46
    %v49 = vmul.f32 %v39, %v47
    %v50 = vmul.f32 %v23, 0.70710677
    %v51 = vmul.f32 %v24, 0.70710677
    %v52 = verf.f32.pop %v50
    %v53 = verf.f32.pop %v51
    %v54 = vadd.f32 %v52, 1.0
    %v55 = vadd.f32 %v53, 1.0
    %v56 = vmul.f32 %v54, 0.5
    %v57 = vmul.f32 %v55, 0.5
    %v58 = vmul.f32 %v56, 0.3
    %v59 = vmul.f32 %v57, 0.3
    %v60 = vmul.f32 %v48, 0.7
    %v61 = vmul.f32 %v49, 0.7
    %v62 = vadd.f32 %v58, %v60
    %v63 = vadd.f32 %v59, %v61
    %v64 = vmul.f32 %v23, %v62
    %v65 = vmul.f32 %v24, %v63
    %66 = vst.msk [vmem:[#allocation5] sm:$0xff] %vm27, %v64
    %67 = vst.msk [vmem:[#allocation5 + $0x8] sm:$0xff] %vm27, %v65
    // Predicated region
    $region10: #{tpu_custom_call.1} parent=1 // pred_check
      _
    $region11: #{tpu_custom_call.1} parent=1 // pred_check_branch
      %69 = sbr.rel (0) target = $region13
    $region12: #{tpu_custom_call.1} parent=1 // pred_region
      %s71 = ssub.s32 256, 256
      %72 = vsyncadd [#allocation4], %s71
      %s73 = sshll.u32 [#allocation5], 4
      %s74 = int_to_ptr.vmem [resolvable:$true] %s73
      %79 = dma.vmem_to_hbm [thread:$0]  %s74, 256, %s1, [#allocation4], 128, 128, 8
    $region13: #{tpu_custom_call.1} parent=1 // pred_fallthru
      _
    // Predicated region
    $region14: #{tpu_custom_call.1} parent=1 // pred_check
      _
    $region15: #{tpu_custom_call.1} parent=1 // pred_check_branch
      %81 = sbr.rel (0) target = $region17
    $region16: #{tpu_custom_call.1} parent=1 // pred_region
      %82 = dma.done [#allocation4], 256
    $region17: #{tpu_custom_call.1} parent=1 // pred_fallthru
      _
    %83 = vsyncpa [#allocation3], 1
    %84 = vsyncpa [#allocation4], 1

</llo_original>
